<compile_context>
chip_gen: v5e
topology: v5e:2x2
jax: 0.10.0
libtpu: 0.0.40
codegen_flags: <defaults>
</compile_context>

<pallas_src>
import functools

import jax
import jax.numpy as jnp
import numpy as np
from jax.experimental import pallas as pl
from jax.experimental.pallas import tpu as pltpu


# Rows of the SMEM coefficient table (indexed by timestep along axis 1).
_C_SQRT_RECIP = 0     # sqrt(1 / alphas_cumprod)
_C_SQRT_RECIPM1 = 1   # sqrt(1 / alphas_cumprod - 1)
_C_MEAN1 = 2          # posterior_mean_coef1
_C_MEAN2 = 3          # posterior_mean_coef2
_C_SIGMA = 4          # exp(0.5 * posterior_log_variance_clipped); sigma[0] == 0


def _noise_predictor_kernel(t_ref, tab_ref, x_ref, noise_ref, randn_ref, out_ref,
                            *, clip_min, clip_max):
    """Elementwise hot path of NaiveNoisePredictor.forward.

    t_ref   : scalar-prefetch SMEM int32[1]   -- diffusion timestep
    tab_ref : SMEM float32[5, num_timesteps]  -- fused coefficient table
    x/noise/randn/out : lane-dense VMEM tiles of shape (block_rows, lane)
    """
    t = t_ref[0]
    c_recip = tab_ref[_C_SQRT_RECIP, t]
    c_recipm1 = tab_ref[_C_SQRT_RECIPM1, t]
    mc1 = tab_ref[_C_MEAN1, t]
    mc2 = tab_ref[_C_MEAN2, t]
    sigma = tab_ref[_C_SIGMA, t]          # (t > 0) mask is baked in: sigma[0] == 0

    x = x_ref[...].astype(jnp.float32)
    noise = noise_ref[...].astype(jnp.float32)
    randn = randn_ref[...].astype(jnp.float32)

    # predict_start_from_noise + clamp
    eps = jnp.clip(c_recip * x - c_recipm1 * noise, clip_min, clip_max)
    # q_posterior mean + sampled noise
    out_ref[...] = (mc1 * eps + mc2 * x + sigma * randn).astype(out_ref.dtype)


def naive_noise_predictor_buffers(betas):
    """Replicates the buffer math from NaiveNoisePredictor.__init__ (float32),
    plus the fused (5, T) coefficient table consumed by the kernel."""
    betas = np.asarray(betas, dtype=np.float64)
    alphas = 1.0 - betas
    alphas_cumprod = np.cumprod(alphas, axis=0)
    alphas_cumprod_prev = np.append(1.0, alphas_cumprod[:-1])
    posterior_variance = betas * (1.0 - alphas_cumprod_prev) / (1.0 - alphas_cumprod)
    posterior_log_variance_clipped = np.log(np.maximum(posterior_variance, 1e-20))
    sqrt_recip = np.sqrt(1.0 / alphas_cumprod)
    sqrt_recipm1 = np.sqrt(1.0 / alphas_cumprod - 1.0)
    mean_coef1 = betas * np.sqrt(alphas_cumprod_prev) / (1.0 - alphas_cumprod)
    mean_coef2 = (1.0 - alphas_cumprod_prev) * np.sqrt(alphas) / (1.0 - alphas_cumprod)
    sigma = np.exp(0.5 * posterior_log_variance_clipped)
    sigma = sigma.copy()
    sigma[0] = 0.0   # bake the (t > 0) nonzero_mask into the table

    coef_table = np.stack(
        [sqrt_recip, sqrt_recipm1, mean_coef1, mean_coef2, sigma], axis=0
    ).astype(np.float32)

    bufs = dict(
        sqrt_recip_alphas_cumprod=sqrt_recip,
        sqrt_recipm1_alphas_cumprod=sqrt_recipm1,
        posterior_variance=posterior_variance,
        posterior_log_variance_clipped=posterior_log_variance_clipped,
        posterior_mean_coef1=mean_coef1,
        posterior_mean_coef2=mean_coef2,
    )
    bufs = {k: jnp.asarray(v, dtype=jnp.float32) for k, v in bufs.items()}
    bufs["coef_table"] = jnp.asarray(coef_table)
    return bufs


_LANE_CANDIDATES = (4096, 2048, 1024, 512, 256, 128)
# ~4 MiB per operand per grid step.  4 operands x 2 pipeline buffers -> ~32 MiB.
_MAX_BLOCK_BYTES = 4 << 20
# Explicit scoped-VMEM budget: headroom over the 32 MiB pipeline footprint but
# safely under v7x's 64 MiB physical VMEM per TensorCore (v5e/v6e have 128 MiB).
_VMEM_LIMIT_BYTES = 48 << 20


def _flat_layout(n_elements, sublane):
    """Pick a lane-dense (rows, lane) factorization, padding ragged sizes.

    Returns (padded_n, rows, lane) with lane >= 128, rows a positive multiple
    of `sublane`, so every vreg is full and every store is unmasked."""
    for lane in _LANE_CANDIDATES:                   # use the array as-is if possible
        rows = n_elements // lane
        if n_elements % lane == 0 and rows >= sublane and rows % sublane == 0:
            return n_elements, rows, lane
    # Pad up to a full (sublane x 1024) granule; then lane=1024 always yields
    # rows that are a positive multiple of `sublane`.
    granule = sublane * 1024
    padded = ((n_elements + granule - 1) // granule) * granule
    for lane in _LANE_CANDIDATES:
        rows = padded // lane
        if padded % lane == 0 and rows >= sublane and rows % sublane == 0:
            return padded, rows, lane
    return padded, padded // 1024, 1024             # unreachable safety net


def _pick_block_rows(rows, lane, itemsize, sublane):
    """Largest sublane-aligned block under the VMEM budget; >= 2 grid steps
    when possible (v7x megacore); prefer a divisor of rows (no ragged block)."""
    budget = _MAX_BLOCK_BYTES // (lane * itemsize)
    budget = max(sublane, (budget // sublane) * sublane)
    block = min(rows, budget)
    if rows >= 2 * sublane:
        half = -(-rows // 2)                        # cdiv(rows, 2)
        half = -(-half // sublane) * sublane        # round up to sublane multiple
        block = min(block, half)
    block = max(sublane, (block // sublane) * sublane)
    if rows % block != 0:
        # Look for a divisor of rows no smaller than half the budgeted block;
        # otherwise accept one ragged (OOB-masked) last grid step.
        for cand in range(block - sublane, max(sublane, block // 2) - 1, -sublane):
            if cand >= sublane and rows % cand == 0:
                return cand
    return block


@functools.partial(jax.jit, static_argnames=("clip_min", "clip_max", "in_place"))
def naive_noise_predictor_forward(coef_table, x, t, noise, randn,
                                  clip_min=-1.0, clip_max=1.0, in_place=False):
    """x, noise, randn: (B, M, T) in f32 or bf16.  t: single shared timestep
    (the module's `extract(a, t).reshape((1, 1, 1))` semantics).  randn plays
    the role of torch.randn_like(x) and is supplied by the caller for
    determinism.  in_place=True aliases x's buffer to the output (useful in a
    sampling loop where x_{t-1} overwrites x_t)."""
    orig_shape = x.shape
    n = int(np.prod(orig_shape))
    itemsize = jnp.dtype(x.dtype).itemsize
    sublane = max(8, 32 // itemsize)                # 8 f32 / 16 bf16 / 32 int8
    padded_n, rows, lane = _flat_layout(n, sublane)
    pad = padded_n - n

    block_rows = _pick_block_rows(rows, lane, itemsize, sublane)
    num_blocks = -(-rows // block_rows)

    # Clamp t so an out-of-range timestep cannot read adjacent SMEM.
    num_t = coef_table.shape[1]
    t_arr = jnp.reshape(jnp.clip(jnp.asarray(t, dtype=jnp.int32), 0, num_t - 1), (1,))

    def _prep(a):
        flat = a.reshape(-1)
        if pad:
            flat = jnp.pad(flat, (0, pad))
        return flat.reshape(rows, lane)

    x2, noise2, randn2 = _prep(x), _prep(noise), _prep(randn)

    # NOTE: a per-sample t (shape (B,)) would need per-row coefficient
    # selection; the reference module only supports a single scalar t.
    tensor_spec = pl.BlockSpec((block_rows, lane), lambda i, t_sref: (i, 0))

    kernel = functools.partial(
        _noise_predictor_kernel,
        clip_min=float(clip_min), clip_max=float(clip_max))

    # Flat input indices: 0=t_arr (scalar prefetch), 1=coef_table, 2=x2, ...
    io_aliases = {2: 0} if in_place else {}

    out2 = pl.pallas_call(
        kernel,
        out_shape=jax.ShapeDtypeStruct((rows, lane), x.dtype),
        grid_spec=pltpu.PrefetchScalarGridSpec(
            num_scalar_prefetch=1,                                  # t -> SMEM
            grid=(num_blocks,),
            in_specs=[
                pl.BlockSpec(memory_space=pltpu.MemorySpace.SMEM),  # coef table
                tensor_spec,   # x
                tensor_spec,   # noise
                tensor_spec,   # randn
            ],
            out_specs=tensor_spec,
        ),
        input_output_aliases=io_aliases,
        compiler_params=pltpu.CompilerParams(
            dimension_semantics=("parallel",),
            vmem_limit_bytes=_VMEM_LIMIT_BYTES),
    )(t_arr, coef_table, x2, noise2, randn2)

    out_flat = out2.reshape(-1)
    if pad:
        out_flat = out_flat[:n]
    return out_flat.reshape(orig_shape)


def _reference_forward(buffers, x, t, noise, randn, clip_min=-1.0, clip_max=1.0):
    """Pure-JAX reference mirroring the PyTorch module (randn supplied)."""
    x = x.astype(jnp.float32)
    noise = noise.astype(jnp.float32)
    randn = randn.astype(jnp.float32)
    c_recip = buffers["sqrt_recip_alphas_cumprod"][t]
    c_recipm1 = buffers["sqrt_recipm1_alphas_cumprod"][t]
    eps = c_recip * x - c_recipm1 * noise
    eps = jnp.clip(eps, clip_min, clip_max)
    mean = (buffers["posterior_mean_coef1"][t] * eps
            + buffers["posterior_mean_coef2"][t] * x)
    log_var = buffers["posterior_log_variance_clipped"][t]
    nonzero_mask = (jnp.asarray(t) > 0).astype(jnp.float32)
    return mean + nonzero_mask * jnp.exp(0.5 * log_var) * randn


if __name__ == "__main__":
    # Deterministic beta schedule (linear), as fish_diffusion would construct.
    num_timesteps = 50
    betas = np.linspace(1e-4, 0.02, num_timesteps)
    buffers = naive_noise_predictor_buffers(betas)
    table = buffers["coef_table"]

    # Small shapes: batch=2, mel-channels=32, frames=128.
    B, M, T = 2, 32, 128
    key = jax.random.PRNGKey(0)
    kx, kn, kr = jax.random.split(key, 3)
    x = jax.random.normal(kx, (B, M, T), dtype=jnp.float32)
    noise = jax.random.normal(kn, (B, M, T), dtype=jnp.float32)
    # torch.randn_like(x) inside forward -> generated deterministically here and
    # fed to both the kernel and the reference.
    randn = jax.random.normal(kr, (B, M, T), dtype=jnp.float32)

    t = 25  # diffusion timestep index
    out = jax.block_until_ready(
        naive_noise_predictor_forward(table, x, t, noise, randn))
    ref = _reference_forward(buffers, x, jnp.int32(t), noise, randn)
    np.testing.assert_allclose(np.asarray(out), np.asarray(ref), rtol=1e-5, atol=1e-5)

    # t == 0 branch: sigma[0] == 0 in the table -> no added noise.
    out0 = jax.block_until_ready(
        naive_noise_predictor_forward(table, x, 0, noise, randn))
    ref0 = _reference_forward(buffers, x, jnp.int32(0), noise, randn)
    np.testing.assert_allclose(np.asarray(out0), np.asarray(ref0), rtol=1e-5, atol=1e-5)

    # In-place variant (x buffer aliased to the output) must give identical values.
    out_ip = jax.block_until_ready(
        naive_noise_predictor_forward(table, x, t, noise, randn, in_place=True))
    np.testing.assert_allclose(np.asarray(out_ip), np.asarray(ref), rtol=1e-5, atol=1e-5)

    # Ragged frame count -> exercises the pad-to-(8x1024)-granule path.
    Tr = 107
    xr = jax.random.normal(kx, (B, M, Tr), dtype=jnp.float32)
    nr = jax.random.normal(kn, (B, M, Tr), dtype=jnp.float32)
    rr = jax.random.normal(kr, (B, M, Tr), dtype=jnp.float32)
    out_r = jax.block_until_ready(
        naive_noise_predictor_forward(table, xr, t, nr, rr))
    ref_r = _reference_forward(buffers, xr, jnp.int32(t), nr, rr)
    np.testing.assert_allclose(np.asarray(out_r), np.asarray(ref_r), rtol=1e-5, atol=1e-5)

    # bf16 I/O path (in-kernel math stays f32); halves HBM traffic on this
    # bandwidth-bound op.
    xb, nb, rb = (a.astype(jnp.bfloat16) for a in (x, noise, randn))
    out_b = jax.block_until_ready(
        naive_noise_predictor_forward(table, xb, t, nb, rb))
    ref_b = _reference_forward(buffers, xb, jnp.int32(t), nb, rb)
    np.testing.assert_allclose(np.asarray(out_b, dtype=np.float32),
                               np.asarray(ref_b), rtol=5e-2, atol=5e-2)

    print("KERNEL_OK")
</pallas_src>

<mosaic_0001>
module attributes {stable_mosaic.version = 11 : i64} {
  func.func @_noise_predictor_kernel(%arg0: i32, %arg1: memref<1xi32, #tpu.memory_space<smem>>, %arg2: memref<5x50xf32, #tpu.memory_space<smem>>, %arg3: memref<8x1024xf32, #tpu.memory_space<vmem>>, %arg4: memref<8x1024xf32, #tpu.memory_space<vmem>>, %arg5: memref<8x1024xf32, #tpu.memory_space<vmem>>, %arg6: memref<8x1024xf32, #tpu.memory_space<vmem>>) attributes {dimension_semantics = [#tpu.dimension_semantics<parallel>], iteration_bounds = array<i64: 1>, scalar_prefetch = 1 : i64, scratch_operands = 0 : i64, tpu.core_type = #tpu.core_type<tc>, window_params = [{transform_indices = @transform_0, window_bounds = array<i64: 5, 50>}, {transform_indices = @transform_1, window_bounds = array<i64: 8, 1024>}, {transform_indices = @transform_2, window_bounds = array<i64: 8, 1024>}, {transform_indices = @transform_3, window_bounds = array<i64: 8, 1024>}, {transform_indices = @transform_4, window_bounds = array<i64: 8, 1024>}]} {
    %c0 = arith.constant 0 : index
    %0 = memref.load %arg1[%c0] : memref<1xi32, #tpu.memory_space<smem>>
    %c0_0 = arith.constant 0 : index
    %1 = arith.index_cast %0 : i32 to index
    %2 = memref.load %arg2[%c0_0, %1] : memref<5x50xf32, #tpu.memory_space<smem>>
    %c1 = arith.constant 1 : index
    %3 = arith.index_cast %0 : i32 to index
    %4 = memref.load %arg2[%c1, %3] : memref<5x50xf32, #tpu.memory_space<smem>>
    %c2 = arith.constant 2 : index
    %5 = arith.index_cast %0 : i32 to index
    %6 = memref.load %arg2[%c2, %5] : memref<5x50xf32, #tpu.memory_space<smem>>
    %c3 = arith.constant 3 : index
    %7 = arith.index_cast %0 : i32 to index
    %8 = memref.load %arg2[%c3, %7] : memref<5x50xf32, #tpu.memory_space<smem>>
    %c4 = arith.constant 4 : index
    %9 = arith.index_cast %0 : i32 to index
    %10 = memref.load %arg2[%c4, %9] : memref<5x50xf32, #tpu.memory_space<smem>>
    %c0_1 = arith.constant 0 : index
    %c0_2 = arith.constant 0 : index
    %11 = vector.load %arg3[%c0_1, %c0_2] : memref<8x1024xf32, #tpu.memory_space<vmem>>, vector<8x1024xf32>
    %c0_3 = arith.constant 0 : index
    %c0_4 = arith.constant 0 : index
    %12 = vector.load %arg4[%c0_3, %c0_4] : memref<8x1024xf32, #tpu.memory_space<vmem>>, vector<8x1024xf32>
    %c0_5 = arith.constant 0 : index
    %c0_6 = arith.constant 0 : index
    %13 = vector.load %arg5[%c0_5, %c0_6] : memref<8x1024xf32, #tpu.memory_space<vmem>>, vector<8x1024xf32>
    %14 = vector.broadcast %2 : f32 to vector<8x1024xf32>
    %15 = arith.mulf %14, %11 : vector<8x1024xf32>
    %16 = vector.broadcast %4 : f32 to vector<8x1024xf32>
    %17 = arith.mulf %16, %12 : vector<8x1024xf32>
    %18 = arith.subf %15, %17 : vector<8x1024xf32>
    %cst = arith.constant -1.000000e+00 : f32
    %cst_7 = arith.constant 1.000000e+00 : f32
    %19 = vector.broadcast %cst : f32 to vector<8x1024xf32>
    %20 = arith.maximumf %19, %18 : vector<8x1024xf32>
    %21 = vector.broadcast %cst_7 : f32 to vector<8x1024xf32>
    %22 = arith.minimumf %21, %20 : vector<8x1024xf32>
    %23 = vector.broadcast %6 : f32 to vector<8x1024xf32>
    %24 = arith.mulf %23, %22 : vector<8x1024xf32>
    %25 = vector.broadcast %8 : f32 to vector<8x1024xf32>
    %26 = arith.mulf %25, %11 : vector<8x1024xf32>
    %27 = arith.addf %24, %26 : vector<8x1024xf32>
    %28 = vector.broadcast %10 : f32 to vector<8x1024xf32>
    %29 = arith.mulf %28, %13 : vector<8x1024xf32>
    %30 = arith.addf %27, %29 : vector<8x1024xf32>
    %c0_8 = arith.constant 0 : index
    %c0_9 = arith.constant 0 : index
    %31 = vector.load %arg6[%c0_8, %c0_9] : memref<8x1024xf32, #tpu.memory_space<vmem>>, vector<8x1024xf32>
    tpu.vector_store %arg6[%c0_8, %c0_9], %30 {strides = array<i32>} : memref<8x1024xf32, #tpu.memory_space<vmem>>, vector<8x1024xf32>,
    return
  }
  func.func @transform_0(%arg0: i32, %arg1: memref<1xi32, #tpu.memory_space<smem>>) -> (i32, i32) {
    %c0_i32 = arith.constant 0 : i32
    %c0_i32_0 = arith.constant 0 : i32
    %c0_i32_1 = arith.constant 0 : i32
    return %c0_i32, %c0_i32_0 : i32, i32
  }
  func.func @transform_1(%arg0: i32, %arg1: memref<1xi32, #tpu.memory_space<smem>>) -> (i32, i32) {
    %c0_i32 = arith.constant 0 : i32
    %c0_i32_0 = arith.constant 0 : i32
    return %arg0, %c0_i32 : i32, i32
  }
  func.func @transform_2(%arg0: i32, %arg1: memref<1xi32, #tpu.memory_space<smem>>) -> (i32, i32) {
    %c0_i32 = arith.constant 0 : i32
    %c0_i32_0 = arith.constant 0 : i32
    return %arg0, %c0_i32 : i32, i32
  }
  func.func @transform_3(%arg0: i32, %arg1: memref<1xi32, #tpu.memory_space<smem>>) -> (i32, i32) {
    %c0_i32 = arith.constant 0 : i32
    %c0_i32_0 = arith.constant 0 : i32
    return %arg0, %c0_i32 : i32, i32
  }
  func.func @transform_4(%arg0: i32, %arg1: memref<1xi32, #tpu.memory_space<smem>>) -> (i32, i32) {
    %c0_i32 = arith.constant 0 : i32
    %c0_i32_0 = arith.constant 0 : i32
    return %arg0, %c0_i32 : i32, i32
  }
}

</mosaic_0001>

<llo_original>
// kernel: naive_noise_predictor_forward.1
$region0: #{naive_noise_predictor_forward.1}
  #allocation0 [shape = 'u32[]', space=smem, size = 0x4, offset = 0x4, fixed_abs, tag = 'smem constant byte address 0x4 - core index']
  #allocation1 [shape = 'u32[72,128]{1,0:T(1,128)}', space=vmem, size = 0x9000, scoped, tag = 'internal scratch']
  #allocation2 [shape = 's32[1]{0}', space=sflag, size = 0x4, scoped, tag = 'scoped memory for naive_noise_predictor_forward.1']
  #allocation3 [shape = 's32[1]{0:T(128)S(6)}', space=smem, size = 0x200, scoped, tag = 'prefetched SMEM operand 0']
  %s0 = inlined_call_operand.<no memory space> [shape: s32[1], index: 0, kind: input, shape index: {}]
  %s1 = inlined_call_operand.vmem [shape: f32[5,50], index: 1, kind: input, shape index: {}]
  %s2 = inlined_call_operand.vmem [shape: f32[8,1024], index: 2, kind: input, shape index: {}]
  %s3 = inlined_call_operand.vmem [shape: f32[8,1024], index: 3, kind: input, shape index: {}]
  %s4 = inlined_call_operand.vmem [shape: f32[8,1024], index: 4, kind: input, shape index: {}]
  %s5 = inlined_call_operand.vmem [shape: f32[8,1024], index: 5, kind: output, shape index: {}]
  %s6 = sld [smem:[#allocation0]]
  $region30: #{naive_noise_predictor_forward.1} parent=0
    _
  %s8 = ssub.s32 1, %s6
  %s9 = scalar_select 0, %s8, %s6
  %10 = sst [smem:[#allocation3]] %s0
  $region1: #{naive_noise_predictor_forward.1} parent=0
    #allocation4 [shape = 'u8[4096]{0}', space=smem, size = 0x1000, scoped, tag = 'input window, operand 1, single buffered']
    #allocation5 [shape = 's32[1]{0}', space=sflag, size = 0x4, scoped, tag = 'scoped memory for naive_noise_predictor_forward.1']
    %11 = vsyncpa [#allocation5], 0
    // Predicated region
    $region2: #{naive_noise_predictor_forward.1} parent=1 // pred_check
      _
    $region3: #{naive_noise_predictor_forward.1} parent=1 // pred_check_branch
      %13 = sbr.rel (0) target = $region5
    $region4: #{naive_noise_predictor_forward.1} parent=1 // pred_region
      %15 = vsyncadd [#allocation5], 0
      %s17 = sshll.u32 %s1, 4
      %s18 = int_to_ptr.vmem [resolvable:$true] %s17
      %20 = dma.vmem_to_smem %s18, 128, [#allocation4], [#allocation5]
    $region5: #{naive_noise_predictor_forward.1} parent=1 // pred_fallthru
      _
    // Predicated region
    $region6: #{naive_noise_predictor_forward.1} parent=1 // pred_check
      _
    $region7: #{naive_noise_predictor_forward.1} parent=1 // pred_check_branch
      %22 = sbr.rel (0) target = $region9
    $region8: #{naive_noise_predictor_forward.1} parent=1 // pred_region
      _
    $region9: #{naive_noise_predictor_forward.1} parent=1 // pred_fallthru
      _
    // Predicated region
    $region10: #{naive_noise_predictor_forward.1} parent=1 // pred_check
      _
    $region11: #{naive_noise_predictor_forward.1} parent=1 // pred_check_branch
      %24 = sbr.rel (0) target = $region13
    $region12: #{naive_noise_predictor_forward.1} parent=1 // pred_region
      _
    $region13: #{naive_noise_predictor_forward.1} parent=1 // pred_fallthru
      _
    // Predicated region
    $region14: #{naive_noise_predictor_forward.1} parent=1 // pred_check
      _
    $region15: #{naive_noise_predictor_forward.1} parent=1 // pred_check_branch
      %26 = sbr.rel (0) target = $region17
    $region16: #{naive_noise_predictor_forward.1} parent=1 // pred_region
      _
    $region17: #{naive_noise_predictor_forward.1} parent=1 // pred_fallthru
      _
    // Predicated region
    $region18: #{naive_noise_predictor_forward.1} parent=1 // pred_check
      _
    $region19: #{naive_noise_predictor_forward.1} parent=1 // pred_check_branch
      %28 = sbr.rel (0) target = $region21
    $region20: #{naive_noise_predictor_forward.1} parent=1 // pred_region
      %30 = dma.done [#allocation5], 128
    $region21: #{naive_noise_predictor_forward.1} parent=1 // pred_fallthru
      _
    %31 = sfence
    %s32 = sld [smem:[#allocation3]]
    %s33 = sld [smem:[#allocation4 + %s32]]
    %s34 = sshra.s32 %s32, 7
    %s35 = sand.u32 %s32, 127
    %s36 = sadd.s32 %s34, 1
    %s37 = smul.u32 %s36, 128
    %s38 = sshra.s32 %s32, 7
    %s39 = sand.u32 %s32, 127
    %s40 = sadd.s32 %s37, %s39
    %s41 = sld [smem:[#allocation4 + %s40]]
    %s42 = sadd.s32 %s34, 2
    %s43 = smul.u32 %s42, 128
    %s44 = sadd.s32 %s43, %s39
    %s45 = sld [smem:[#allocation4 + %s44]]
    %s46 = sadd.s32 %s34, 3
    %s47 = smul.u32 %s46, 128
    %s48 = sadd.s32 %s47, %s39
    %s49 = sld [smem:[#allocation4 + %s48]]
    %s50 = sadd.s32 %s34, 4
    %s51 = smul.u32 %s50, 128
    %s52 = sadd.s32 %s51, %s39
    %s53 = sld [smem:[#allocation4 + %s52]]
    %v54 = vld [vmem:[%s2] sm:$0xff]
    %v55 = vld [vmem:[%s2 + $0x8] sm:$0xff]
    %v56 = vld [vmem:[%s2 + $0x10] sm:$0xff]
    %v57 = vld [vmem:[%s2 + $0x18] sm:$0xff]
    %v58 = vld [vmem:[%s2 + $0x20] sm:$0xff]
    %v59 = vld [vmem:[%s2 + $0x28] sm:$0xff]
    %v60 = vld [vmem:[%s2 + $0x30] sm:$0xff]
    %v61 = vld [vmem:[%s2 + $0x38] sm:$0xff]
    %v62 = vld [vmem:[%s3] sm:$0xff]
    %v63 = vld [vmem:[%s3 + $0x8] sm:$0xff]
    %v64 = vld [vmem:[%s3 + $0x10] sm:$0xff]
    %v65 = vld [vmem:[%s3 + $0x18] sm:$0xff]
    %v66 = vld [vmem:[%s3 + $0x20] sm:$0xff]
    %v67 = vld [vmem:[%s3 + $0x28] sm:$0xff]
    %v68 = vld [vmem:[%s3 + $0x30] sm:$0xff]
    %v69 = vld [vmem:[%s3 + $0x38] sm:$0xff]
    %v70 = vld [vmem:[%s4] sm:$0xff]
    %v71 = vld [vmem:[%s4 + $0x8] sm:$0xff]
    %v72 = vld [vmem:[%s4 + $0x10] sm:$0xff]
    %v73 = vld [vmem:[%s4 + $0x18] sm:$0xff]
    %v74 = vld [vmem:[%s4 + $0x20] sm:$0xff]
    %v75 = vld [vmem:[%s4 + $0x28] sm:$0xff]
    %v76 = vld [vmem:[%s4 + $0x30] sm:$0xff]
    %v77 = vld [vmem:[%s4 + $0x38] sm:$0xff]
    %v78 = vstv %s33
    %v79 = vmul.f32 %v78, %v54
    %v80 = vmul.f32 %v78, %v55
    %v81 = vmul.f32 %v78, %v56
    %v82 = vmul.f32 %v78, %v57
    %v83 = vmul.f32 %v78, %v58
    %v84 = vmul.f32 %v78, %v59
    %v85 = vmul.f32 %v78, %v60
    %v86 = vmul.f32 %v78, %v61
    %v87 = vstv %s41
    %v88 = vmul.f32 %v87, %v62
    %v89 = vmul.f32 %v87, %v63
    %v90 = vmul.f32 %v87, %v64
    %v91 = vmul.f32 %v87, %v65
    %v92 = vmul.f32 %v87, %v66
    %v93 = vmul.f32 %v87, %v67
    %v94 = vmul.f32 %v87, %v68
    %v95 = vmul.f32 %v87, %v69
    %v96 = vsub.f32 %v79, %v88
    %v97 = vsub.f32 %v80, %v89
    %v98 = vsub.f32 %v81, %v90
    %v99 = vsub.f32 %v82, %v91
    %v100 = vsub.f32 %v83, %v92
    %v101 = vsub.f32 %v84, %v93
    %v102 = vsub.f32 %v85, %v94
    %v103 = vsub.f32 %v86, %v95
    %v104 = vmax.f32 %v96, -1.0
    %v105 = vmax.f32 %v97, -1.0
    %v106 = vmax.f32 %v98, -1.0
    %v107 = vmax.f32 %v99, -1.0
    %v108 = vmax.f32 %v100, -1.0
    %v109 = vmax.f32 %v101, -1.0
    %v110 = vmax.f32 %v102, -1.0
    %v111 = vmax.f32 %v103, -1.0
    %v112 = vmin.f32 %v104, 1.0
    %v113 = vmin.f32 %v105, 1.0
    %v114 = vmin.f32 %v106, 1.0
    %v115 = vmin.f32 %v107, 1.0
    %v116 = vmin.f32 %v108, 1.0
    %v117 = vmin.f32 %v109, 1.0
    %v118 = vmin.f32 %v110, 1.0
    %v119 = vmin.f32 %v111, 1.0
    %v120 = vstv %s45
    %v121 = vmul.f32 %v120, %v112
    %v122 = vmul.f32 %v120, %v113
    %v123 = vmul.f32 %v120, %v114
    %v124 = vmul.f32 %v120, %v115
    %v125 = vmul.f32 %v120, %v116
    %v126 = vmul.f32 %v120, %v117
    %v127 = vmul.f32 %v120, %v118
    %v128 = vmul.f32 %v120, %v119
    %v129 = vstv %s49
    %v130 = vmul.f32 %v129, %v54
    %v131 = vmul.f32 %v129, %v55
    %v132 = vmul.f32 %v129, %v56
    %v133 = vmul.f32 %v129, %v57
    %v134 = vmul.f32 %v129, %v58
    %v135 = vmul.f32 %v129, %v59
    %v136 = vmul.f32 %v129, %v60
    %v137 = vmul.f32 %v129, %v61
    %v138 = vadd.f32 %v121, %v130
    %v139 = vadd.f32 %v122, %v131
    %v140 = vadd.f32 %v123, %v132
    %v141 = vadd.f32 %v124, %v133
    %v142 = vadd.f32 %v125, %v134
    %v143 = vadd.f32 %v126, %v135
    %v144 = vadd.f32 %v127, %v136
    %v145 = vadd.f32 %v128, %v137
    %v146 = vstv %s53
    %v147 = vmul.f32 %v146, %v70
    %v148 = vmul.f32 %v146, %v71
    %v149 = vmul.f32 %v146, %v72
    %v150 = vmul.f32 %v146, %v73
    %v151 = vmul.f32 %v146, %v74
    %v152 = vmul.f32 %v146, %v75
    %v153 = vmul.f32 %v146, %v76
    %v154 = vmul.f32 %v146, %v77
    %v155 = vadd.f32 %v138, %v147
    %v156 = vadd.f32 %v139, %v148
    %v157 = vadd.f32 %v140, %v149
    %v158 = vadd.f32 %v141, %v150
    %v159 = vadd.f32 %v142, %v151
    %v160 = vadd.f32 %v143, %v152
    %v161 = vadd.f32 %v144, %v153
    %v162 = vadd.f32 %v145, %v154
    %163 = vst [vmem:[%s5] sm:$0xff] %v155
    %164 = vst [vmem:[%s5 + $0x8] sm:$0xff] %v156
    %165 = vst [vmem:[%s5 + $0x10] sm:$0xff] %v157
    %166 = vst [vmem:[%s5 + $0x18] sm:$0xff] %v158
    %167 = vst [vmem:[%s5 + $0x20] sm:$0xff] %v159
    %168 = vst [vmem:[%s5 + $0x28] sm:$0xff] %v160
    %169 = vst [vmem:[%s5 + $0x30] sm:$0xff] %v161
    %170 = vst [vmem:[%s5 + $0x38] sm:$0xff] %v162
    // Predicated region
    $region22: #{naive_noise_predictor_forward.1} parent=1 // pred_check
      _
    $region23: #{naive_noise_predictor_forward.1} parent=1 // pred_check_branch
      %172 = sbr.rel (0) target = $region25
    $region24: #{naive_noise_predictor_forward.1} parent=1 // pred_region
      _
    $region25: #{naive_noise_predictor_forward.1} parent=1 // pred_fallthru
      _
    // Predicated region
    $region26: #{naive_noise_predictor_forward.1} parent=1 // pred_check
      _
    $region27: #{naive_noise_predictor_forward.1} parent=1 // pred_check_branch
      %174 = sbr.rel (0) target = $region29
    $region28: #{naive_noise_predictor_forward.1} parent=1 // pred_region
      _
    $region29: #{naive_noise_predictor_forward.1} parent=1 // pred_fallthru
      _
    %175 = vsyncpa [#allocation5], 1

</llo_original>
